<compile_context>
chip_gen: v6e
topology: v6e:2x2x1
jax: 0.10.0
libtpu: 0.0.40
codegen_flags: <defaults>
</compile_context>

<pallas_src>
import jax
import jax.numpy as jnp
import numpy as np
from jax import lax
from jax.experimental import pallas as pl
from jax.experimental.pallas import tpu as pltpu

# ---- deterministic synthetic "geotiff" metadata (replaces rasterio) --------
C = 8            # LDMC, LDMC_sd, LNC, LNC_sd, LPC, LPC_sd, SLA, SLA_sd
H = 16           # raster rows (small synthetic raster)
W = 16           # raster cols
HW = H * W
WEST = -180.0    # geotransform origin (upper-left corner)
NORTH = 90.0
XRES = 360.0 / W   # pixel width  (degrees / pixel)
YRES = 180.0 / H   # pixel height (degrees / pixel)

B_TILE = 256     # batch rows per grid step (multiple of 256: MXU/lane aligned)


def _gtm_kernel(ll_ref, ras_ref, out_ref):
    """Fused lon/lat -> pixel index -> one-hot MXU gather.

    ll_ref : (2, B_TILE) f32  row 0 = lon, row 1 = lat (batch on the lane axis)
    ras_ref: (C, HW)     f32  full raster table, VMEM-resident
    out_ref: (C, B_TILE) f32  lane-dense output slab
    """
    bt = ll_ref.shape[1]
    lon = ll_ref[0:1, :]                                     # (1, BT)
    lat = ll_ref[1:2, :]                                     # (1, BT)

    # Inverse affine transform == rasterio refras.index(lon, lat), on the VPU.
    col = jnp.floor((lon - WEST) / XRES).astype(jnp.int32)
    row = jnp.floor((NORTH - lat) / YRES).astype(jnp.int32)
    row = jnp.clip(row, 0, H - 1)
    col = jnp.clip(col, 0, W - 1)
    flat = row * W + col                                     # (1, BT), in [0, HW)

    # One-hot selection matrix (HW, BT); the gather is a single MXU matmul:
    #   out[c, b] = sum_p ras[c, p] * onehot[p, b]
    pix = lax.broadcasted_iota(jnp.int32, (HW, bt), 0)       # (HW, BT)
    onehot = (pix == flat).astype(jnp.float32)               # exactly one 1 per column
    out_ref[...] = jnp.dot(
        ras_ref[...],
        onehot,
        preferred_element_type=jnp.float32,
        precision=lax.Precision.HIGHEST,   # f32-accurate contract for real f32 rasters
    )


@jax.jit
def gtm_loc_enc(lonlat, rasters):
    """lonlat: (B, 2) f32 [lon, lat]; rasters: (C, H, W) f32. Returns (B, C)."""
    B = lonlat.shape[0]
    B_pad = pl.cdiv(B, B_TILE) * B_TILE

    # Channels-first, spatially flattened raster table: (C, HW) == 8 KiB.
    ras_cf = rasters.reshape(C, HW).astype(jnp.float32)

    # Batch on the lane axis: (2, B_pad); pad with (0, 0) which maps to a valid
    # in-range pixel (padded results are sliced off below).
    ll_t = jnp.zeros((2, B_pad), jnp.float32).at[:, :B].set(lonlat.T)

    out_t = pl.pallas_call(
        _gtm_kernel,
        out_shape=jax.ShapeDtypeStruct((C, B_pad), jnp.float32),
        grid=(B_pad // B_TILE,),
        in_specs=[
            pl.BlockSpec((2, B_TILE), lambda i: (0, i)),   # lon/lat tile
            pl.BlockSpec((C, HW), lambda i: (0, 0)),       # constant block -> resident
        ],
        out_specs=pl.BlockSpec((C, B_TILE), lambda i: (0, i)),  # lane-dense store
        compiler_params=pltpu.CompilerParams(
            dimension_semantics=("parallel",),             # shard batch tiles across TCs
        ),
    )(ll_t, ras_cf)

    return out_t.T[:B]                                     # (B, C)


if __name__ == "__main__":
    key = jax.random.PRNGKey(0)
    k_ras, k_lon, k_lat = jax.random.split(key, 3)

    B = 8
    # Synthetic trait rasters. Values are rounded to bf16-representable f32 so
    # the bit-exact (atol=0) check below is independent of the MXU contract
    # precision; the indexing/gather logic is what is verified exactly.
    rasters = jax.random.normal(k_ras, (C, H, W), dtype=jnp.float32)
    rasters = rasters.astype(jnp.bfloat16).astype(jnp.float32)

    lon = jax.random.uniform(k_lon, (B, 1), minval=-179.0, maxval=179.0)
    lat = jax.random.uniform(k_lat, (B, 1), minval=-89.0, maxval=89.0)
    lonlat = jnp.concatenate([lon, lat], axis=1).astype(jnp.float32)   # (B, 2)

    out = jax.block_until_ready(gtm_loc_enc(lonlat, rasters))

    # Pure-numpy reference of the PyTorch forward (float32 index math to match
    # the on-device arithmetic).
    ras_np = np.asarray(rasters)
    ll_np = np.asarray(lonlat)
    ref = np.zeros((B, C), dtype=np.float32)
    for b in range(B):
        lo = np.float32(ll_np[b, 0])
        la = np.float32(ll_np[b, 1])
        col = int(np.floor((lo - np.float32(WEST)) / np.float32(XRES)))
        row = int(np.floor((np.float32(NORTH) - la) / np.float32(YRES)))
        row = min(max(row, 0), H - 1)
        col = min(max(col, 0), W - 1)
        ref[b] = ras_np[:, row, col]

    assert out.shape == (B, C), out.shape
    np.testing.assert_allclose(np.asarray(out), ref, rtol=0, atol=0)
    print("KERNEL_OK")
</pallas_src>

<mosaic_0001>
module attributes {stable_mosaic.version = 11 : i64} {
  func.func @_gtm_kernel(%arg0: i32, %arg1: memref<2x256xf32, #tpu.memory_space<vmem>>, %arg2: memref<8x256xf32, #tpu.memory_space<vmem>>, %arg3: memref<8x256xf32, #tpu.memory_space<vmem>>) attributes {dimension_semantics = [#tpu.dimension_semantics<parallel>], iteration_bounds = array<i64: 1>, scalar_prefetch = 0 : i64, scratch_operands = 0 : i64, tpu.core_type = #tpu.core_type<tc>, window_params = [{transform_indices = @transform_0, window_bounds = array<i64: 2, 256>}, {pipeline_mode = #tpu.pipeline_mode<synchronous>, transform_indices = @transform_1, window_bounds = array<i64: 8, 256>}, {transform_indices = @transform_2, window_bounds = array<i64: 8, 256>}]} {
    %c0 = arith.constant 0 : index
    %c0_0 = arith.constant 0 : index
    %0 = vector.load %arg1[%c0, %c0_0] : memref<2x256xf32, #tpu.memory_space<vmem>>, vector<1x256xf32>
    %c1 = arith.constant 1 : index
    %c0_1 = arith.constant 0 : index
    %1 = vector.load %arg1[%c1, %c0_1] : memref<2x256xf32, #tpu.memory_space<vmem>>, vector<1x256xf32>
    %cst = arith.constant -1.800000e+02 : f32
    %2 = vector.broadcast %cst : f32 to vector<1x256xf32>
    %3 = arith.subf %0, %2 : vector<1x256xf32>
    %cst_2 = arith.constant 2.250000e+01 : f32
    %4 = vector.broadcast %cst_2 : f32 to vector<1x256xf32>
    %5 = arith.divf %3, %4 : vector<1x256xf32>
    %6 = math.floor %5 : vector<1x256xf32>
    %7 = arith.fptosi %6 : vector<1x256xf32> to vector<1x256xi32>
    %cst_3 = arith.constant 9.000000e+01 : f32
    %8 = vector.broadcast %cst_3 : f32 to vector<1x256xf32>
    %9 = arith.subf %8, %1 : vector<1x256xf32>
    %cst_4 = arith.constant 1.125000e+01 : f32
    %10 = vector.broadcast %cst_4 : f32 to vector<1x256xf32>
    %11 = arith.divf %9, %10 : vector<1x256xf32>
    %12 = math.floor %11 : vector<1x256xf32>
    %13 = arith.fptosi %12 : vector<1x256xf32> to vector<1x256xi32>
    %c0_i32 = arith.constant 0 : i32
    %c15_i32 = arith.constant 15 : i32
    %14 = vector.broadcast %c0_i32 : i32 to vector<1x256xi32>
    %15 = arith.maxsi %14, %13 : vector<1x256xi32>
    %16 = vector.broadcast %c15_i32 : i32 to vector<1x256xi32>
    %17 = arith.minsi %16, %15 : vector<1x256xi32>
    %c0_i32_5 = arith.constant 0 : i32
    %c15_i32_6 = arith.constant 15 : i32
    %18 = vector.broadcast %c0_i32_5 : i32 to vector<1x256xi32>
    %19 = arith.maxsi %18, %7 : vector<1x256xi32>
    %20 = vector.broadcast %c15_i32_6 : i32 to vector<1x256xi32>
    %21 = arith.minsi %20, %19 : vector<1x256xi32>
    %c16_i32 = arith.constant 16 : i32
    %22 = vector.broadcast %c16_i32 : i32 to vector<1x256xi32>
    %23 = arith.muli %17, %22 : vector<1x256xi32>
    %24 = arith.addi %23, %21 : vector<1x256xi32>
    %25 = tpu.iota {dimensions = array<i32: 0>} : vector<256x256xi32>
    %26 = vector.broadcast %24 : vector<1x256xi32> to vector<256x256xi32>
    %27 = arith.cmpi eq, %25, %26 : vector<256x256xi32>
    %28 = arith.extui %27 : vector<256x256xi1> to vector<256x256xi32>
    %29 = arith.sitofp %28 : vector<256x256xi32> to vector<256x256xf32>
    %c0_7 = arith.constant 0 : index
    %c0_8 = arith.constant 0 : index
    %30 = vector.load %arg2[%c0_7, %c0_8] : memref<8x256xf32, #tpu.memory_space<vmem>>, vector<8x256xf32>
    %cst_9 = arith.constant dense<0.000000e+00> : vector<8x256xf32>
    %31 = tpu.matmul %30, %29, %cst_9 {dimension_numbers = #tpu.dot_dimension_numbers<[1], [0], [0], [1], [0, 0, 1, 1], [], []>, precision = #tpu.contract_precision<fp32>} : vector<8x256xf32>, vector<256x256xf32>, vector<8x256xf32> -> vector<8x256xf32>
    %c0_10 = arith.constant 0 : index
    %c0_11 = arith.constant 0 : index
    %32 = vector.load %arg3[%c0_10, %c0_11] : memref<8x256xf32, #tpu.memory_space<vmem>>, vector<8x256xf32>
    tpu.vector_store %arg3[%c0_10, %c0_11], %31 {strides = array<i32>} : memref<8x256xf32, #tpu.memory_space<vmem>>, vector<8x256xf32>,
    return
  }
  func.func @transform_0(%arg0: i32) -> (i32, i32) {
    %c0_i32 = arith.constant 0 : i32
    %c0_i32_0 = arith.constant 0 : i32
    return %c0_i32, %arg0 : i32, i32
  }
  func.func @transform_1(%arg0: i32) -> (i32, i32) {
    %c0_i32 = arith.constant 0 : i32
    %c0_i32_0 = arith.constant 0 : i32
    %c0_i32_1 = arith.constant 0 : i32
    return %c0_i32, %c0_i32_0 : i32, i32
  }
  func.func @transform_2(%arg0: i32) -> (i32, i32) {
    %c0_i32 = arith.constant 0 : i32
    %c0_i32_0 = arith.constant 0 : i32
    return %c0_i32, %arg0 : i32, i32
  }
}

</mosaic_0001>

<llo_original>
// kernel: gtm_loc_enc.1
$region0: #{gtm_loc_enc.1}
  #allocation0 [shape = 'u32[]', space=smem, size = 0x4, offset = 0x4, fixed_abs, tag = 'smem constant byte address 0x4 - core index']
  #allocation1 [shape = 'u32[144,128]{1,0:T(1,128)}', space=vmem, size = 0x12000, scoped, tag = 'internal scratch']
  %s0 = inlined_call_operand.vmem [shape: f32[2,256], index: 0, kind: input, shape index: {}]
  %s1 = inlined_call_operand.vmem [shape: f32[8,256], index: 1, kind: input, shape index: {}]
  %s2 = inlined_call_operand.vmem [shape: f32[8,256], index: 2, kind: output, shape index: {}]
  %s3 = sld [smem:[#allocation0]]
  $region18: #{gtm_loc_enc.1} parent=0
    _
  %s5 = ssub.s32 1, %s3
  %s6 = scalar_select 0, %s5, %s3
  // Predicated region
  $region2: #{gtm_loc_enc.1} parent=0 // pred_check
    _
  $region3: #{gtm_loc_enc.1} parent=0 // pred_check_branch
    %8 = sbr.rel (0) target = $region5
  $region4: #{gtm_loc_enc.1} parent=0 // pred_region
    _
  $region5: #{gtm_loc_enc.1} parent=0 // pred_fallthru
    _
  // Predicated region
  $region6: #{gtm_loc_enc.1} parent=0 // pred_check
    _
  $region7: #{gtm_loc_enc.1} parent=0 // pred_check_branch
    %10 = sbr.rel (0) target = $region9
  $region8: #{gtm_loc_enc.1} parent=0 // pred_region
    _
  $region9: #{gtm_loc_enc.1} parent=0 // pred_fallthru
    _
  %v11 = vld [vmem:[%s0] ss:$2 sm:$0x3]
  %s12 = scalar_lea.vmem %s0, 1
  %v13 = vld [vmem:[%s12] ss:$2 sm:$0x3]
  %v14 = vsub.f32 %v11, -180.0
  %v15 = vrcp.pop 22.5
  %v16 = vmul.f32 %v14, %v15
  %v17 = vfloor.f32 %v16
  %v18 = vcvt.f32.s32.to.zero.pseudo %v17
  %v19 = vsub.f32 90.0, %v13
  %v20 = vrcp.pop 11.25
  %v21 = vmul.f32 %v19, %v20
  %v22 = vfloor.f32 %v21
  %v23 = vcvt.f32.s32.to.zero.pseudo %v22
  %vm24 = vcmp.gt.s32.totalorder %v23, 0
  %v25 = vsel %vm24, %v23, 0
  %vm26 = vcmp.lt.s32.totalorder %v25, 15
  %v27 = vsel %vm26, %v25, 15
  %vm28 = vcmp.gt.s32.totalorder %v18, 0
  %v29 = vsel %vm28, %v18, 0
  %vm30 = vcmp.lt.s32.totalorder %v29, 15
  %v31 = vsel %vm30, %v29, 15
  %v32 = vmul.u32 %v27, 16
  %v33 = vadd.s32 %v32, %v31
  %v34 = vlaneseq
  %v35 = vshrl.u32 %v34, 7
  %v36 = vadd.s32 %v35, 8
  %v37 = vadd.s32 %v35, 16
  %v38 = vadd.s32 %v35, 24
  %v39 = vadd.s32 %v35, 32
  %v40 = vadd.s32 %v35, 40
  %v41 = vadd.s32 %v35, 48
  %v42 = vadd.s32 %v35, 56
  %v43 = vadd.s32 %v35, 64
  %v44 = vadd.s32 %v35, 72
  %v45 = vadd.s32 %v35, 80
  %v46 = vadd.s32 %v35, 88
  %v47 = vadd.s32 %v35, 96
  %v48 = vadd.s32 %v35, 104
  %v49 = vadd.s32 %v35, 112
  %v50 = vadd.s32 %v35, 120
  %v51 = vadd.s32 %v35, 128
  %v52 = vadd.s32 %v35, 136
  %v53 = vadd.s32 %v35, 144
  %v54 = vadd.s32 %v35, 152
  %v55 = vadd.s32 %v35, 160
  %v56 = vadd.s32 %v35, 168
  %v57 = vadd.s32 %v35, 176
  %v58 = vadd.s32 %v35, 184
  %v59 = vadd.s32 %v35, 192
  %v60 = vadd.s32 %v35, 200
  %v61 = vadd.s32 %v35, 208
  %v62 = vadd.s32 %v35, 216
  %v63 = vadd.s32 %v35, 224
  %v64 = vadd.s32 %v35, 232
  %v65 = vadd.s32 %v35, 240
  %v66 = vadd.s32 %v35, 248
  %v67 = vlaneseq
  %v68 = vshrl.u32 %v67, 7
  %v69 = vsub.s32 0, %v68
  %v70 = vrot.slane %v33, %v69
  %v71 = vlaneseq
  %v72 = vshrl.u32 %v71, 7
  %v73 = vsub.s32 1, %v72
  %v74 = vrot.slane %v33, %v73
  %vm75 = vcmp.eq.s32.totalorder %v35, %v70
  %vm76 = vcmp.eq.s32.totalorder %v35, %v74
  %vm77 = vcmp.eq.s32.totalorder %v36, %v70
  %vm78 = vcmp.eq.s32.totalorder %v36, %v74
  %vm79 = vcmp.eq.s32.totalorder %v37, %v70
  %vm80 = vcmp.eq.s32.totalorder %v37, %v74
  %vm81 = vcmp.eq.s32.totalorder %v38, %v70
  %vm82 = vcmp.eq.s32.totalorder %v38, %v74
  %vm83 = vcmp.eq.s32.totalorder %v39, %v70
  %vm84 = vcmp.eq.s32.totalorder %v39, %v74
  %vm85 = vcmp.eq.s32.totalorder %v40, %v70
  %vm86 = vcmp.eq.s32.totalorder %v40, %v74
  %vm87 = vcmp.eq.s32.totalorder %v41, %v70
  %vm88 = vcmp.eq.s32.totalorder %v41, %v74
  %vm89 = vcmp.eq.s32.totalorder %v42, %v70
  %vm90 = vcmp.eq.s32.totalorder %v42, %v74
  %vm91 = vcmp.eq.s32.totalorder %v43, %v70
  %vm92 = vcmp.eq.s32.totalorder %v43, %v74
  %vm93 = vcmp.eq.s32.totalorder %v44, %v70
  %vm94 = vcmp.eq.s32.totalorder %v44, %v74
  %vm95 = vcmp.eq.s32.totalorder %v45, %v70
  %vm96 = vcmp.eq.s32.totalorder %v45, %v74
  %vm97 = vcmp.eq.s32.totalorder %v46, %v70
  %vm98 = vcmp.eq.s32.totalorder %v46, %v74
  %vm99 = vcmp.eq.s32.totalorder %v47, %v70
  %vm100 = vcmp.eq.s32.totalorder %v47, %v74
  %vm101 = vcmp.eq.s32.totalorder %v48, %v70
  %vm102 = vcmp.eq.s32.totalorder %v48, %v74
  %vm103 = vcmp.eq.s32.totalorder %v49, %v70
  %vm104 = vcmp.eq.s32.totalorder %v49, %v74
  %vm105 = vcmp.eq.s32.totalorder %v50, %v70
  %vm106 = vcmp.eq.s32.totalorder %v50, %v74
  %vm107 = vcmp.eq.s32.totalorder %v51, %v70
  %vm108 = vcmp.eq.s32.totalorder %v51, %v74
  %vm109 = vcmp.eq.s32.totalorder %v52, %v70
  %vm110 = vcmp.eq.s32.totalorder %v52, %v74
  %vm111 = vcmp.eq.s32.totalorder %v53, %v70
  %vm112 = vcmp.eq.s32.totalorder %v53, %v74
  %vm113 = vcmp.eq.s32.totalorder %v54, %v70
  %vm114 = vcmp.eq.s32.totalorder %v54, %v74
  %vm115 = vcmp.eq.s32.totalorder %v55, %v70
  %vm116 = vcmp.eq.s32.totalorder %v55, %v74
  %vm117 = vcmp.eq.s32.totalorder %v56, %v70
  %vm118 = vcmp.eq.s32.totalorder %v56, %v74
  %vm119 = vcmp.eq.s32.totalorder %v57, %v70
  %vm120 = vcmp.eq.s32.totalorder %v57, %v74
  %vm121 = vcmp.eq.s32.totalorder %v58, %v70
  %vm122 = vcmp.eq.s32.totalorder %v58, %v74
  %vm123 = vcmp.eq.s32.totalorder %v59, %v70
  %vm124 = vcmp.eq.s32.totalorder %v59, %v74
  %vm125 = vcmp.eq.s32.totalorder %v60, %v70
  %vm126 = vcmp.eq.s32.totalorder %v60, %v74
  %vm127 = vcmp.eq.s32.totalorder %v61, %v70
  %vm128 = vcmp.eq.s32.totalorder %v61, %v74
  %vm129 = vcmp.eq.s32.totalorder %v62, %v70
  %vm130 = vcmp.eq.s32.totalorder %v62, %v74
  %vm131 = vcmp.eq.s32.totalorder %v63, %v70
  %vm132 = vcmp.eq.s32.totalorder %v63, %v74
  %vm133 = vcmp.eq.s32.totalorder %v64, %v70
  %vm134 = vcmp.eq.s32.totalorder %v64, %v74
  %vm135 = vcmp.eq.s32.totalorder %v65, %v70
  %vm136 = vcmp.eq.s32.totalorder %v65, %v74
  %vm137 = vcmp.eq.s32.totalorder %v66, %v70
  %vm138 = vcmp.eq.s32.totalorder %v66, %v74
  %v139 = vsel %vm75, 1, 0
  %v140 = vsel %vm76, 1, 0
  %v141 = vsel %vm77, 1, 0
  %v142 = vsel %vm78, 1, 0
  %v143 = vsel %vm79, 1, 0
  %v144 = vsel %vm80, 1, 0
  %v145 = vsel %vm81, 1, 0
  %v146 = vsel %vm82, 1, 0
  %v147 = vsel %vm83, 1, 0
  %v148 = vsel %vm84, 1, 0
  %v149 = vsel %vm85, 1, 0
  %v150 = vsel %vm86, 1, 0
  %v151 = vsel %vm87, 1, 0
  %v152 = vsel %vm88, 1, 0
  %v153 = vsel %vm89, 1, 0
  %v154 = vsel %vm90, 1, 0
  %v155 = vsel %vm91, 1, 0
  %v156 = vsel %vm92, 1, 0
  %v157 = vsel %vm93, 1, 0
  %v158 = vsel %vm94, 1, 0
  %v159 = vsel %vm95, 1, 0
  %v160 = vsel %vm96, 1, 0
  %v161 = vsel %vm97, 1, 0
  %v162 = vsel %vm98, 1, 0
  %v163 = vsel %vm99, 1, 0
  %v164 = vsel %vm100, 1, 0
  %v165 = vsel %vm101, 1, 0
  %v166 = vsel %vm102, 1, 0
  %v167 = vsel %vm103, 1, 0
  %v168 = vsel %vm104, 1, 0
  %v169 = vsel %vm105, 1, 0
  %v170 = vsel %vm106, 1, 0
  %v171 = vsel %vm107, 1, 0
  %v172 = vsel %vm108, 1, 0
  %v173 = vsel %vm109, 1, 0
  %v174 = vsel %vm110, 1, 0
  %v175 = vsel %vm111, 1, 0
  %v176 = vsel %vm112, 1, 0
  %v177 = vsel %vm113, 1, 0
  %v178 = vsel %vm114, 1, 0
  %v179 = vsel %vm115, 1, 0
  %v180 = vsel %vm116, 1, 0
  %v181 = vsel %vm117, 1, 0
  %v182 = vsel %vm118, 1, 0
  %v183 = vsel %vm119, 1, 0
  %v184 = vsel %vm120, 1, 0
  %v185 = vsel %vm121, 1, 0
  %v186 = vsel %vm122, 1, 0
  %v187 = vsel %vm123, 1, 0
  %v188 = vsel %vm124, 1, 0
  %v189 = vsel %vm125, 1, 0
  %v190 = vsel %vm126, 1, 0
  %v191 = vsel %vm127, 1, 0
  %v192 = vsel %vm128, 1, 0
  %v193 = vsel %vm129, 1, 0
  %v194 = vsel %vm130, 1, 0
  %v195 = vsel %vm131, 1, 0
  %v196 = vsel %vm132, 1, 0
  %v197 = vsel %vm133, 1, 0
  %v198 = vsel %vm134, 1, 0
  %v199 = vsel %vm135, 1, 0
  %v200 = vsel %vm136, 1, 0
  %v201 = vsel %vm137, 1, 0
  %v202 = vsel %vm138, 1, 0
  %v203 = vcvt.s32.f32 %v139
  %v204 = vcvt.s32.f32 %v140
  %v205 = vcvt.s32.f32 %v141
  %v206 = vcvt.s32.f32 %v142
  %v207 = vcvt.s32.f32 %v143
  %v208 = vcvt.s32.f32 %v144
  %v209 = vcvt.s32.f32 %v145
  %v210 = vcvt.s32.f32 %v146
  %v211 = vcvt.s32.f32 %v147
  %v212 = vcvt.s32.f32 %v148
  %v213 = vcvt.s32.f32 %v149
  %v214 = vcvt.s32.f32 %v150
  %v215 = vcvt.s32.f32 %v151
  %v216 = vcvt.s32.f32 %v152
  %v217 = vcvt.s32.f32 %v153
  %v218 = vcvt.s32.f32 %v154
  %v219 = vcvt.s32.f32 %v155
  %v220 = vcvt.s32.f32 %v156
  %v221 = vcvt.s32.f32 %v157
  %v222 = vcvt.s32.f32 %v158
  %v223 = vcvt.s32.f32 %v159
  %v224 = vcvt.s32.f32 %v160
  %v225 = vcvt.s32.f32 %v161
  %v226 = vcvt.s32.f32 %v162
  %v227 = vcvt.s32.f32 %v163
  %v228 = vcvt.s32.f32 %v164
  %v229 = vcvt.s32.f32 %v165
  %v230 = vcvt.s32.f32 %v166
  %v231 = vcvt.s32.f32 %v167
  %v232 = vcvt.s32.f32 %v168
  %v233 = vcvt.s32.f32 %v169
  %v234 = vcvt.s32.f32 %v170
  %v235 = vcvt.s32.f32 %v171
  %v236 = vcvt.s32.f32 %v172
  %v237 = vcvt.s32.f32 %v173
  %v238 = vcvt.s32.f32 %v174
  %v239 = vcvt.s32.f32 %v175
  %v240 = vcvt.s32.f32 %v176
  %v241 = vcvt.s32.f32 %v177
  %v242 = vcvt.s32.f32 %v178
  %v243 = vcvt.s32.f32 %v179
  %v244 = vcvt.s32.f32 %v180
  %v245 = vcvt.s32.f32 %v181
  %v246 = vcvt.s32.f32 %v182
  %v247 = vcvt.s32.f32 %v183
  %v248 = vcvt.s32.f32 %v184
  %v249 = vcvt.s32.f32 %v185
  %v250 = vcvt.s32.f32 %v186
  %v251 = vcvt.s32.f32 %v187
  %v252 = vcvt.s32.f32 %v188
  %v253 = vcvt.s32.f32 %v189
  %v254 = vcvt.s32.f32 %v190
  %v255 = vcvt.s32.f32 %v191
  %v256 = vcvt.s32.f32 %v192
  %v257 = vcvt.s32.f32 %v193
  %v258 = vcvt.s32.f32 %v194
  %v259 = vcvt.s32.f32 %v195
  %v260 = vcvt.s32.f32 %v196
  %v261 = vcvt.s32.f32 %v197
  %v262 = vcvt.s32.f32 %v198
  %v263 = vcvt.s32.f32 %v199
  %v264 = vcvt.s32.f32 %v200
  %v265 = vcvt.s32.f32 %v201
  %v266 = vcvt.s32.f32 %v202
  %v267 = vld [vmem:[%s1] sm:$0xff]
  %v268 = vld [vmem:[%s1 + $0x8] sm:$0xff]
  %v269 = vand.u32 %v234, 4294901760
  %270 = vmatprep.subr.mxu0 %v269
  %v271 = vand.u32 %v233, 4294901760
  %272 = vmatpush1.msra.mxu0 %v271
  %v273 = vand.u32 %v232, 4294901760
  %274 = vmatprep.subr.mxu0 %v273
  %v275 = vand.u32 %v231, 4294901760
  %276 = vmatpush1.msra.mxu0 %v275
  %v277 = vand.u32 %v230, 4294901760
  %278 = vmatprep.subr.mxu0 %v277
  %v279 = vand.u32 %v229, 4294901760
  %280 = vmatpush1.msra.mxu0 %v279
  %v281 = vand.u32 %v228, 4294901760
  %282 = vmatprep.subr.mxu0 %v281
  %v283 = vand.u32 %v227, 4294901760
  %284 = vmatpush1.msra.mxu0 %v283
  %v285 = vand.u32 %v226, 4294901760
  %286 = vmatprep.subr.mxu0 %v285
  %v287 = vand.u32 %v225, 4294901760
  %288 = vmatpush1.msra.mxu0 %v287
  %v289 = vand.u32 %v224, 4294901760
  %290 = vmatprep.subr.mxu0 %v289
  %v291 = vand.u32 %v223, 4294901760
  %292 = vmatpush1.msra.mxu0 %v291
  %v293 = vand.u32 %v222, 4294901760
  %294 = vmatprep.subr.mxu0 %v293
  %v295 = vand.u32 %v221, 4294901760
  %296 = vmatpush1.msra.mxu0 %v295
  %v297 = vand.u32 %v220, 4294901760
  %298 = vmatprep.subr.mxu0 %v297
  %v299 = vand.u32 %v219, 4294901760
  %300 = vmatpush1.msra.mxu0 %v299
  %v301 = vand.u32 %v218, 4294901760
  %302 = vmatprep.subr.mxu0 %v301
  %v303 = vand.u32 %v217, 4294901760
  %304 = vmatpush1.msra.mxu0 %v303
  %v305 = vand.u32 %v216, 4294901760
  %306 = vmatprep.subr.mxu0 %v305
  %v307 = vand.u32 %v215, 4294901760
  %308 = vmatpush1.msra.mxu0 %v307
  %v309 = vand.u32 %v214, 4294901760
  %310 = vmatprep.subr.mxu0 %v309
  %v311 = vand.u32 %v213, 4294901760
  %312 = vmatpush1.msra.mxu0 %v311
  %v313 = vand.u32 %v212, 4294901760
  %314 = vmatprep.subr.mxu0 %v313
  %v315 = vand.u32 %v211, 4294901760
  %316 = vmatpush1.msra.mxu0 %v315
  %v317 = vand.u32 %v210, 4294901760
  %318 = vmatprep.subr.mxu0 %v317
  %v319 = vand.u32 %v209, 4294901760
  %320 = vmatpush1.msra.mxu0 %v319
  %v321 = vand.u32 %v208, 4294901760
  %322 = vmatprep.subr.mxu0 %v321
  %v323 = vand.u32 %v207, 4294901760
  %324 = vmatpush1.msra.mxu0 %v323
  %v325 = vand.u32 %v206, 4294901760
  %326 = vmatprep.subr.mxu0 %v325
  %v327 = vand.u32 %v205, 4294901760
  %328 = vmatpush1.msra.mxu0 %v327
  %v329 = vand.u32 %v204, 4294901760
  %330 = vmatprep.subr.mxu0 %v329
  %v331 = vand.u32 %v203, 4294901760
  %332 = vmatpush1.msra.mxu0 %v331
  %v333 = vand.u32 %v266, 4294901760
  %334 = vmatprep.subr.mxu0 %v333
  %v335 = vand.u32 %v265, 4294901760
  %336 = vmatpush2.msra.mxu0 %v335
  %v337 = vand.u32 %v264, 4294901760
  %338 = vmatprep.subr.mxu0 %v337
  %v339 = vand.u32 %v263, 4294901760
  %340 = vmatpush2.msra.mxu0 %v339
  %v341 = vand.u32 %v262, 4294901760
  %342 = vmatprep.subr.mxu0 %v341
  %v343 = vand.u32 %v261, 4294901760
  %344 = vmatpush2.msra.mxu0 %v343
  %v345 = vand.u32 %v260, 4294901760
  %346 = vmatprep.subr.mxu0 %v345
  %v347 = vand.u32 %v259, 4294901760
  %348 = vmatpush2.msra.mxu0 %v347
  %v349 = vand.u32 %v258, 4294901760
  %350 = vmatprep.subr.mxu0 %v349
  %v351 = vand.u32 %v257, 4294901760
  %352 = vmatpush2.msra.mxu0 %v351
  %v353 = vand.u32 %v256, 4294901760
  %354 = vmatprep.subr.mxu0 %v353
  %v355 = vand.u32 %v255, 4294901760
  %356 = vmatpush2.msra.mxu0 %v355
  %v357 = vand.u32 %v254, 4294901760
  %358 = vmatprep.subr.mxu0 %v357
  %v359 = vand.u32 %v253, 4294901760
  %360 = vmatpush2.msra.mxu0 %v359
  %v361 = vand.u32 %v252, 4294901760
  %362 = vmatprep.subr.mxu0 %v361
  %v363 = vand.u32 %v251, 4294901760
  %364 = vmatpush2.msra.mxu0 %v363
  %v365 = vand.u32 %v250, 4294901760
  %366 = vmatprep.subr.mxu0 %v365
  %v367 = vand.u32 %v249, 4294901760
  %368 = vmatpush2.msra.mxu0 %v367
  %v369 = vand.u32 %v248, 4294901760
  %370 = vmatprep.subr.mxu0 %v369
  %v371 = vand.u32 %v247, 4294901760
  %372 = vmatpush2.msra.mxu0 %v371
  %v373 = vand.u32 %v246, 4294901760
  %374 = vmatprep.subr.mxu0 %v373
  %v375 = vand.u32 %v245, 4294901760
  %376 = vmatpush2.msra.mxu0 %v375
  %v377 = vand.u32 %v244, 4294901760
  %378 = vmatprep.subr.mxu0 %v377
  %v379 = vand.u32 %v243, 4294901760
  %380 = vmatpush2.msra.mxu0 %v379
  %v381 = vand.u32 %v242, 4294901760
  %382 = vmatprep.subr.mxu0 %v381
  %v383 = vand.u32 %v241, 4294901760
  %384 = vmatpush2.msra.mxu0 %v383
  %v385 = vand.u32 %v240, 4294901760
  %386 = vmatprep.subr.mxu0 %v385
  %v387 = vand.u32 %v239, 4294901760
  %388 = vmatpush2.msra.mxu0 %v387
  %v389 = vand.u32 %v238, 4294901760
  %390 = vmatprep.subr.mxu0 %v389
  %v391 = vand.u32 %v237, 4294901760
  %392 = vmatpush2.msra.mxu0 %v391
  %v393 = vand.u32 %v236, 4294901760
  %394 = vmatprep.subr.mxu0 %v393
  %v395 = vand.u32 %v235, 4294901760
  %396 = vmatpush2.msra.mxu0 %v395
  %v397 = vand.u32 %v268, 4294901760
  %v398 = vsub.f32 %v268, %v397
  %v399 = vand.u32 %v398, 4294901760
  %v400 = vsub.f32 %v398, %v399
  %v401 = vand.u32 %v400, 4294901760
  %402 = vmatprep.mubr.f32.mxu0 %v401
  %v403 = vand.u32 %v267, 4294901760
  %v404 = vsub.f32 %v267, %v403
  %v405 = vand.u32 %v404, 4294901760
  %v406 = vsub.f32 %v404, %v405
  %v407 = vand.u32 %v406, 4294901760
  %408 = vmatmul.mubr.f32.gmra.mxu0 %v407
  %v409 = vpop.f32.mrf.mxu0
  %v410 = vadd.f32 0.0, %v409
  %v411 = vpop.f32.mrf.mxu0
  %v412 = vadd.f32 0.0, %v411
  %413 = vdwg.mxu0
  %v414 = vand.u32 %v234, 4294901760
  %v415 = vsub.f32 %v234, %v414
  %v416 = vand.u32 %v415, 4294901760
  %v417 = vsub.f32 %v415, %v416
  %v418 = vand.u32 %v417, 4294901760
  %419 = vmatprep.subr.mxu0 %v418
  %v420 = vand.u32 %v233, 4294901760
  %v421 = vsub.f32 %v233, %v420
  %v422 = vand.u32 %v421, 4294901760
  %v423 = vsub.f32 %v421, %v422
  %v424 = vand.u32 %v423, 4294901760
  %425 = vmatpush1.msra.mxu0 %v424
  %v426 = vand.u32 %v232, 4294901760
  %v427 = vsub.f32 %v232, %v426
  %v428 = vand.u32 %v427, 4294901760
  %v429 = vsub.f32 %v427, %v428
  %v430 = vand.u32 %v429, 4294901760
  %431 = vmatprep.subr.mxu0 %v430
  %v432 = vand.u32 %v231, 4294901760
  %v433 = vsub.f32 %v231, %v432
  %v434 = vand.u32 %v433, 4294901760
  %v435 = vsub.f32 %v433, %v434
  %v436 = vand.u32 %v435, 4294901760
  %437 = vmatpush1.msra.mxu0 %v436
  %v438 = vand.u32 %v230, 4294901760
  %v439 = vsub.f32 %v230, %v438
  %v440 = vand.u32 %v439, 4294901760
  %v441 = vsub.f32 %v439, %v440
  %v442 = vand.u32 %v441, 4294901760
  %443 = vmatprep.subr.mxu0 %v442
  %v444 = vand.u32 %v229, 4294901760
  %v445 = vsub.f32 %v229, %v444
  %v446 = vand.u32 %v445, 4294901760
  %v447 = vsub.f32 %v445, %v446
  %v448 = vand.u32 %v447, 4294901760
  %449 = vmatpush1.msra.mxu0 %v448
  %v450 = vand.u32 %v228, 4294901760
  %v451 = vsub.f32 %v228, %v450
  %v452 = vand.u32 %v451, 4294901760
  %v453 = vsub.f32 %v451, %v452
  %v454 = vand.u32 %v453, 4294901760
  %455 = vmatprep.subr.mxu0 %v454
  %v456 = vand.u32 %v227, 4294901760
  %v457 = vsub.f32 %v227, %v456
  %v458 = vand.u32 %v457, 4294901760
  %v459 = vsub.f32 %v457, %v458
  %v460 = vand.u32 %v459, 4294901760
  %461 = vmatpush1.msra.mxu0 %v460
  %v462 = vand.u32 %v226, 4294901760
  %v463 = vsub.f32 %v226, %v462
  %v464 = vand.u32 %v463, 4294901760
  %v465 = vsub.f32 %v463, %v464
  %v466 = vand.u32 %v465, 4294901760
  %467 = vmatprep.subr.mxu0 %v466
  %v468 = vand.u32 %v225, 4294901760
  %v469 = vsub.f32 %v225, %v468
  %v470 = vand.u32 %v469, 4294901760
  %v471 = vsub.f32 %v469, %v470
  %v472 = vand.u32 %v471, 4294901760
  %473 = vmatpush1.msra.mxu0 %v472
  %v474 = vand.u32 %v224, 4294901760
  %v475 = vsub.f32 %v224, %v474
  %v476 = vand.u32 %v475, 4294901760
  %v477 = vsub.f32 %v475, %v476
  %v478 = vand.u32 %v477, 4294901760
  %479 = vmatprep.subr.mxu0 %v478
  %v480 = vand.u32 %v223, 4294901760
  %v481 = vsub.f32 %v223, %v480
  %v482 = vand.u32 %v481, 4294901760
  %v483 = vsub.f32 %v481, %v482
  %v484 = vand.u32 %v483, 4294901760
  %485 = vmatpush1.msra.mxu0 %v484
  %v486 = vand.u32 %v222, 4294901760
  %v487 = vsub.f32 %v222, %v486
  %v488 = vand.u32 %v487, 4294901760
  %v489 = vsub.f32 %v487, %v488
  %v490 = vand.u32 %v489, 4294901760
  %491 = vmatprep.subr.mxu0 %v490
  %v492 = vand.u32 %v221, 4294901760
  %v493 = vsub.f32 %v221, %v492
  %v494 = vand.u32 %v493, 4294901760
  %v495 = vsub.f32 %v493, %v494
  %v496 = vand.u32 %v495, 4294901760
  %497 = vmatpush1.msra.mxu0 %v496
  %v498 = vand.u32 %v220, 4294901760
  %v499 = vsub.f32 %v220, %v498
  %v500 = vand.u32 %v499, 4294901760
  %v501 = vsub.f32 %v499, %v500
  %v502 = vand.u32 %v501, 4294901760
  %503 = vmatprep.subr.mxu0 %v502
  %v504 = vand.u32 %v219, 4294901760
  %v505 = vsub.f32 %v219, %v504
  %v506 = vand.u32 %v505, 4294901760
  %v507 = vsub.f32 %v505, %v506
  %v508 = vand.u32 %v507, 4294901760
  %509 = vmatpush1.msra.mxu0 %v508
  %v510 = vand.u32 %v218, 4294901760
  %v511 = vsub.f32 %v218, %v510
  %v512 = vand.u32 %v511, 4294901760
  %v513 = vsub.f32 %v511, %v512
  %v514 = vand.u32 %v513, 4294901760
  %515 = vmatprep.subr.mxu0 %v514
  %v516 = vand.u32 %v217, 4294901760
  %v517 = vsub.f32 %v217, %v516
  %v518 = vand.u32 %v517, 4294901760
  %v519 = vsub.f32 %v517, %v518
  %v520 = vand.u32 %v519, 4294901760
  %521 = vmatpush1.msra.mxu0 %v520
  %v522 = vand.u32 %v216, 4294901760
  %v523 = vsub.f32 %v216, %v522
  %v524 = vand.u32 %v523, 4294901760
  %v525 = vsub.f32 %v523, %v524
  %v526 = vand.u32 %v525, 4294901760
  %527 = vmatprep.subr.mxu0 %v526
  %v528 = vand.u32 %v215, 4294901760
  %v529 = vsub.f32 %v215, %v528
  %v530 = vand.u32 %v529, 4294901760
  %v531 = vsub.f32 %v529, %v530
  %v532 = vand.u32 %v531, 4294901760
  %533 = vmatpush1.msra.mxu0 %v532
  %v534 = vand.u32 %v214, 4294901760
  %v535 = vsub.f32 %v214, %v534
  %v536 = vand.u32 %v535, 4294901760
  %v537 = vsub.f32 %v535, %v536
  %v538 = vand.u32 %v537, 4294901760
  %539 = vmatprep.subr.mxu0 %v538
  %v540 = vand.u32 %v213, 4294901760
  %v541 = vsub.f32 %v213, %v540
  %v542 = vand.u32 %v541, 4294901760
  %v543 = vsub.f32 %v541, %v542
  %v544 = vand.u32 %v543, 4294901760
  %545 = vmatpush1.msra.mxu0 %v544
  %v546 = vand.u32 %v212, 4294901760
  %v547 = vsub.f32 %v212, %v546
  %v548 = vand.u32 %v547, 4294901760
  %v549 = vsub.f32 %v547, %v548
  %v550 = vand.u32 %v549, 4294901760
  %551 = vmatprep.subr.mxu0 %v550
  %v552 = vand.u32 %v211, 4294901760
  %v553 = vsub.f32 %v211, %v552
  %v554 = vand.u32 %v553, 4294901760
  %v555 = vsub.f32 %v553, %v554
  %v556 = vand.u32 %v555, 4294901760
  %557 = vmatpush1.msra.mxu0 %v556
  %v558 = vand.u32 %v210, 4294901760
  %v559 = vsub.f32 %v210, %v558
  %v560 = vand.u32 %v559, 4294901760
  %v561 = vsub.f32 %v559, %v560
  %v562 = vand.u32 %v561, 4294901760
  %563 = vmatprep.subr.mxu0 %v562
  %v564 = vand.u32 %v209, 4294901760
  %v565 = vsub.f32 %v209, %v564
  %v566 = vand.u32 %v565, 4294901760
  %v567 = vsub.f32 %v565, %v566
  %v568 = vand.u32 %v567, 4294901760
  %569 = vmatpush1.msra.mxu0 %v568
  %v570 = vand.u32 %v208, 4294901760
  %v571 = vsub.f32 %v208, %v570
  %v572 = vand.u32 %v571, 4294901760
  %v573 = vsub.f32 %v571, %v572
  %v574 = vand.u32 %v573, 4294901760
  %575 = vmatprep.subr.mxu0 %v574
  %v576 = vand.u32 %v207, 4294901760
  %v577 = vsub.f32 %v207, %v576
  %v578 = vand.u32 %v577, 4294901760
  %v579 = vsub.f32 %v577, %v578
  %v580 = vand.u32 %v579, 4294901760
  %581 = vmatpush1.msra.mxu0 %v580
  %v582 = vand.u32 %v206, 4294901760
  %v583 = vsub.f32 %v206, %v582
  %v584 = vand.u32 %v583, 4294901760
  %v585 = vsub.f32 %v583, %v584
  %v586 = vand.u32 %v585, 4294901760
  %587 = vmatprep.subr.mxu0 %v586
  %v588 = vand.u32 %v205, 4294901760
  %v589 = vsub.f32 %v205, %v588
  %v590 = vand.u32 %v589, 4294901760
  %v591 = vsub.f32 %v589, %v590
  %v592 = vand.u32 %v591, 4294901760
  %593 = vmatpush1.msra.mxu0 %v592
  %v594 = vand.u32 %v204, 4294901760
  %v595 = vsub.f32 %v204, %v594
  %v596 = vand.u32 %v595, 4294901760
  %v597 = vsub.f32 %v595, %v596
  %v598 = vand.u32 %v597, 4294901760
  %599 = vmatprep.subr.mxu0 %v598
  %v600 = vand.u32 %v203, 4294901760
  %v601 = vsub.f32 %v203, %v600
  %v602 = vand.u32 %v601, 4294901760
  %v603 = vsub.f32 %v601, %v602
  %v604 = vand.u32 %v603, 4294901760
  %605 = vmatpush1.msra.mxu0 %v604
  %v606 = vand.u32 %v266, 4294901760
  %v607 = vsub.f32 %v266, %v606
  %v608 = vand.u32 %v607, 4294901760
  %v609 = vsub.f32 %v607, %v608
  %v610 = vand.u32 %v609, 4294901760
  %611 = vmatprep.subr.mxu0 %v610
  %v612 = vand.u32 %v265, 4294901760
  %v613 = vsub.f32 %v265, %v612
  %v614 = vand.u32 %v613, 4294901760
  %v615 = vsub.f32 %v613, %v614
  %v616 = vand.u32 %v615, 4294901760
  %617 = vmatpush2.msra.mxu0 %v616
  %v618 = vand.u32 %v264, 4294901760
  %v619 = vsub.f32 %v264, %v618
  %v620 = vand.u32 %v619, 4294901760
  %v621 = vsub.f32 %v619, %v620
  %v622 = vand.u32 %v621, 4294901760
  %623 = vmatprep.subr.mxu0 %v622
  %v624 = vand.u32 %v263, 4294901760
  %v625 = vsub.f32 %v263, %v624
  %v626 = vand.u32 %v625, 4294901760
  %v627 = vsub.f32 %v625, %v626
  %v628 = vand.u32 %v627, 4294901760
  %629 = vmatpush2.msra.mxu0 %v628
  %v630 = vand.u32 %v262, 4294901760
  %v631 = vsub.f32 %v262, %v630
  %v632 = vand.u32 %v631, 4294901760
  %v633 = vsub.f32 %v631, %v632
  %v634 = vand.u32 %v633, 4294901760
  %635 = vmatprep.subr.mxu0 %v634
  %v636 = vand.u32 %v261, 4294901760
  %v637 = vsub.f32 %v261, %v636
  %v638 = vand.u32 %v637, 4294901760
  %v639 = vsub.f32 %v637, %v638
  %v640 = vand.u32 %v639, 4294901760
  %641 = vmatpush2.msra.mxu0 %v640
  %v642 = vand.u32 %v260, 4294901760
  %v643 = vsub.f32 %v260, %v642
  %v644 = vand.u32 %v643, 4294901760
  %v645 = vsub.f32 %v643, %v644
  %v646 = vand.u32 %v645, 4294901760
  %647 = vmatprep.subr.mxu0 %v646
  %v648 = vand.u32 %v259, 4294901760
  %v649 = vsub.f32 %v259, %v648
  %v650 = vand.u32 %v649, 4294901760
  %v651 = vsub.f32 %v649, %v650
  %v652 = vand.u32 %v651, 4294901760
  %653 = vmatpush2.msra.mxu0 %v652
  %v654 = vand.u32 %v258, 4294901760
  %v655 = vsub.f32 %v258, %v654
  %v656 = vand.u32 %v655, 4294901760
  %v657 = vsub.f32 %v655, %v656
  %v658 = vand.u32 %v657, 4294901760
  %659 = vmatprep.subr.mxu0 %v658
  %v660 = vand.u32 %v257, 4294901760
  %v661 = vsub.f32 %v257, %v660
  %v662 = vand.u32 %v661, 4294901760
  %v663 = vsub.f32 %v661, %v662
  %v664 = vand.u32 %v663, 4294901760
  %665 = vmatpush2.msra.mxu0 %v664
  %v666 = vand.u32 %v256, 4294901760
  %v667 = vsub.f32 %v256, %v666
  %v668 = vand.u32 %v667, 4294901760
  %v669 = vsub.f32 %v667, %v668
  %v670 = vand.u32 %v669, 4294901760
  %671 = vmatprep.subr.mxu0 %v670
  %v672 = vand.u32 %v255, 4294901760
  %v673 = vsub.f32 %v255, %v672
  %v674 = vand.u32 %v673, 4294901760
  %v675 = vsub.f32 %v673, %v674
  %v676 = vand.u32 %v675, 4294901760
  %677 = vmatpush2.msra.mxu0 %v676
  %v678 = vand.u32 %v254, 4294901760
  %v679 = vsub.f32 %v254, %v678
  %v680 = vand.u32 %v679, 4294901760
  %v681 = vsub.f32 %v679, %v680
  %v682 = vand.u32 %v681, 4294901760
  %683 = vmatprep.subr.mxu0 %v682
  %v684 = vand.u32 %v253, 4294901760
  %v685 = vsub.f32 %v253, %v684
  %v686 = vand.u32 %v685, 4294901760
  %v687 = vsub.f32 %v685, %v686
  %v688 = vand.u32 %v687, 4294901760
  %689 = vmatpush2.msra.mxu0 %v688
  %v690 = vand.u32 %v252, 4294901760
  %v691 = vsub.f32 %v252, %v690
  %v692 = vand.u32 %v691, 4294901760
  %v693 = vsub.f32 %v691, %v692
  %v694 = vand.u32 %v693, 4294901760
  %695 = vmatprep.subr.mxu0 %v694
  %v696 = vand.u32 %v251, 4294901760
  %v697 = vsub.f32 %v251, %v696
  %v698 = vand.u32 %v697, 4294901760
  %v699 = vsub.f32 %v697, %v698
  %v700 = vand.u32 %v699, 4294901760
  %701 = vmatpush2.msra.mxu0 %v700
  %v702 = vand.u32 %v250, 4294901760
  %v703 = vsub.f32 %v250, %v702
  %v704 = vand.u32 %v703, 4294901760
  %v705 = vsub.f32 %v703, %v704
  %v706 = vand.u32 %v705, 4294901760
  %707 = vmatprep.subr.mxu0 %v706
  %v708 = vand.u32 %v249, 4294901760
  %v709 = vsub.f32 %v249, %v708
  %v710 = vand.u32 %v709, 4294901760
  %v711 = vsub.f32 %v709, %v710
  %v712 = vand.u32 %v711, 4294901760
  %713 = vmatpush2.msra.mxu0 %v712
  %v714 = vand.u32 %v248, 4294901760
  %v715 = vsub.f32 %v248, %v714
  %v716 = vand.u32 %v715, 4294901760
  %v717 = vsub.f32 %v715, %v716
  %v718 = vand.u32 %v717, 4294901760
  %719 = vmatprep.subr.mxu0 %v718
  %v720 = vand.u32 %v247, 4294901760
  %v721 = vsub.f32 %v247, %v720
  %v722 = vand.u32 %v721, 4294901760
  %v723 = vsub.f32 %v721, %v722
  %v724 = vand.u32 %v723, 4294901760
  %725 = vmatpush2.msra.mxu0 %v724
  %v726 = vand.u32 %v246, 4294901760
  %v727 = vsub.f32 %v246, %v726
  %v728 = vand.u32 %v727, 4294901760
  %v729 = vsub.f32 %v727, %v728
  %v730 = vand.u32 %v729, 4294901760
  %731 = vmatprep.subr.mxu0 %v730
  %v732 = vand.u32 %v245, 4294901760
  %v733 = vsub.f32 %v245, %v732
  %v734 = vand.u32 %v733, 4294901760
  %v735 = vsub.f32 %v733, %v734
  %v736 = vand.u32 %v735, 4294901760
  %737 = vmatpush2.msra.mxu0 %v736
  %v738 = vand.u32 %v244, 4294901760
  %v739 = vsub.f32 %v244, %v738
  %v740 = vand.u32 %v739, 4294901760
  %v741 = vsub.f32 %v739, %v740
  %v742 = vand.u32 %v741, 4294901760
  %743 = vmatprep.subr.mxu0 %v742
  %v744 = vand.u32 %v243, 4294901760
  %v745 = vsub.f32 %v243, %v744
  %v746 = vand.u32 %v745, 4294901760
  %v747 = vsub.f32 %v745, %v746
  %v748 = vand.u32 %v747, 4294901760
  %749 = vmatpush2.msra.mxu0 %v748
  %v750 = vand.u32 %v242, 4294901760
  %v751 = vsub.f32 %v242, %v750
  %v752 = vand.u32 %v751, 4294901760
  %v753 = vsub.f32 %v751, %v752
  %v754 = vand.u32 %v753, 4294901760
  %755 = vmatprep.subr.mxu0 %v754
  %v756 = vand.u32 %v241, 4294901760
  %v757 = vsub.f32 %v241, %v756
  %v758 = vand.u32 %v757, 4294901760
  %v759 = vsub.f32 %v757, %v758
  %v760 = vand.u32 %v759, 4294901760
  %761 = vmatpush2.msra.mxu0 %v760
  %v762 = vand.u32 %v240, 4294901760
  %v763 = vsub.f32 %v240, %v762
  %v764 = vand.u32 %v763, 4294901760
  %v765 = vsub.f32 %v763, %v764
  %v766 = vand.u32 %v765, 4294901760
  %767 = vmatprep.subr.mxu0 %v766
  %v768 = vand.u32 %v239, 4294901760
  %v769 = vsub.f32 %v239, %v768
  %v770 = vand.u32 %v769, 4294901760
  %v771 = vsub.f32 %v769, %v770
  %v772 = vand.u32 %v771, 4294901760
  %773 = vmatpush2.msra.mxu0 %v772
  %v774 = vand.u32 %v238, 4294901760
  %v775 = vsub.f32 %v238, %v774
  %v776 = vand.u32 %v775, 4294901760
  %v777 = vsub.f32 %v775, %v776
  %v778 = vand.u32 %v777, 4294901760
  %779 = vmatprep.subr.mxu0 %v778
  %v780 = vand.u32 %v237, 4294901760
  %v781 = vsub.f32 %v237, %v780
  %v782 = vand.u32 %v781, 4294901760
  %v783 = vsub.f32 %v781, %v782
  %v784 = vand.u32 %v783, 4294901760
  %785 = vmatpush2.msra.mxu0 %v784
  %v786 = vand.u32 %v236, 4294901760
  %v787 = vsub.f32 %v236, %v786
  %v788 = vand.u32 %v787, 4294901760
  %v789 = vsub.f32 %v787, %v788
  %v790 = vand.u32 %v789, 4294901760
  %791 = vmatprep.subr.mxu0 %v790
  %v792 = vand.u32 %v235, 4294901760
  %v793 = vsub.f32 %v235, %v792
  %v794 = vand.u32 %v793, 4294901760
  %v795 = vsub.f32 %v793, %v794
  %v796 = vand.u32 %v795, 4294901760
  %797 = vmatpush2.msra.mxu0 %v796
  %v798 = vand.u32 %v268, 4294901760
  %799 = vmatprep.mubr.f32.mxu0 %v798
  %v800 = vand.u32 %v267, 4294901760
  %801 = vmatmul.mubr.f32.gmra.mxu0 %v800
  %v802 = vpop.f32.mrf.mxu0
  %v803 = vadd.f32 %v410, %v802
  %v804 = vpop.f32.mrf.mxu0
  %v805 = vadd.f32 %v412, %v804
  %806 = vdwg.mxu0
  %v807 = vand.u32 %v234, 4294901760
  %v808 = vsub.f32 %v234, %v807
  %809 = vmatprep.subr.mxu0 %v808
  %v810 = vand.u32 %v233, 4294901760
  %v811 = vsub.f32 %v233, %v810
  %812 = vmatpush1.msra.mxu0 %v811
  %v813 = vand.u32 %v232, 4294901760
  %v814 = vsub.f32 %v232, %v813
  %815 = vmatprep.subr.mxu0 %v814
  %v816 = vand.u32 %v231, 4294901760
  %v817 = vsub.f32 %v231, %v816
  %818 = vmatpush1.msra.mxu0 %v817
  %v819 = vand.u32 %v230, 4294901760
  %v820 = vsub.f32 %v230, %v819
  %821 = vmatprep.subr.mxu0 %v820
  %v822 = vand.u32 %v229, 4294901760
  %v823 = vsub.f32 %v229, %v822
  %824 = vmatpush1.msra.mxu0 %v823
  %v825 = vand.u32 %v228, 4294901760
  %v826 = vsub.f32 %v228, %v825
  %827 = vmatprep.subr.mxu0 %v826
  %v828 = vand.u32 %v227, 4294901760
  %v829 = vsub.f32 %v227, %v828
  %830 = vmatpush1.msra.mxu0 %v829
  %v831 = vand.u32 %v226, 4294901760
  %v832 = vsub.f32 %v226, %v831
  %833 = vmatprep.subr.mxu0 %v832
  %v834 = vand.u32 %v225, 4294901760
  %v835 = vsub.f32 %v225, %v834
  %836 = vmatpush1.msra.mxu0 %v835
  %v837 = vand.u32 %v224, 4294901760
  %v838 = vsub.f32 %v224, %v837
  %839 = vmatprep.subr.mxu0 %v838
  %v840 = vand.u32 %v223, 4294901760
  %v841 = vsub.f32 %v223, %v840
  %842 = vmatpush1.msra.mxu0 %v841
  %v843 = vand.u32 %v222, 4294901760
  %v844 = vsub.f32 %v222, %v843
  %845 = vmatprep.subr.mxu0 %v844
  %v846 = vand.u32 %v221, 4294901760
  %v847 = vsub.f32 %v221, %v846
  %848 = vmatpush1.msra.mxu0 %v847
  %v849 = vand.u32 %v220, 4294901760
  %v850 = vsub.f32 %v220, %v849
  %851 = vmatprep.subr.mxu0 %v850
  %v852 = vand.u32 %v219, 4294901760
  %v853 = vsub.f32 %v219, %v852
  %854 = vmatpush1.msra.mxu0 %v853
  %v855 = vand.u32 %v218, 4294901760
  %v856 = vsub.f32 %v218, %v855
  %857 = vmatprep.subr.mxu0 %v856
  %v858 = vand.u32 %v217, 4294901760
  %v859 = vsub.f32 %v217, %v858
  %860 = vmatpush1.msra.mxu0 %v859
  %v861 = vand.u32 %v216, 4294901760
  %v862 = vsub.f32 %v216, %v861
  %863 = vmatprep.subr.mxu0 %v862
  %v864 = vand.u32 %v215, 4294901760
  %v865 = vsub.f32 %v215, %v864
  %866 = vmatpush1.msra.mxu0 %v865
  %v867 = vand.u32 %v214, 4294901760
  %v868 = vsub.f32 %v214, %v867
  %869 = vmatprep.subr.mxu0 %v868
  %v870 = vand.u32 %v213, 4294901760
  %v871 = vsub.f32 %v213, %v870
  %872 = vmatpush1.msra.mxu0 %v871
  %v873 = vand.u32 %v212, 4294901760
  %v874 = vsub.f32 %v212, %v873
  %875 = vmatprep.subr.mxu0 %v874
  %v876 = vand.u32 %v211, 4294901760
  %v877 = vsub.f32 %v211, %v876
  %878 = vmatpush1.msra.mxu0 %v877
  %v879 = vand.u32 %v210, 4294901760
  %v880 = vsub.f32 %v210, %v879
  %881 = vmatprep.subr.mxu0 %v880
  %v882 = vand.u32 %v209, 4294901760
  %v883 = vsub.f32 %v209, %v882
  %884 = vmatpush1.msra.mxu0 %v883
  %v885 = vand.u32 %v208, 4294901760
  %v886 = vsub.f32 %v208, %v885
  %887 = vmatprep.subr.mxu0 %v886
  %v888 = vand.u32 %v207, 4294901760
  %v889 = vsub.f32 %v207, %v888
  %890 = vmatpush1.msra.mxu0 %v889
  %v891 = vand.u32 %v206, 4294901760
  %v892 = vsub.f32 %v206, %v891
  %893 = vmatprep.subr.mxu0 %v892
  %v894 = vand.u32 %v205, 4294901760
  %v895 = vsub.f32 %v205, %v894
  %896 = vmatpush1.msra.mxu0 %v895
  %v897 = vand.u32 %v204, 4294901760
  %v898 = vsub.f32 %v204, %v897
  %899 = vmatprep.subr.mxu0 %v898
  %v900 = vand.u32 %v203, 4294901760
  %v901 = vsub.f32 %v203, %v900
  %902 = vmatpush1.msra.mxu0 %v901
  %v903 = vand.u32 %v266, 4294901760
  %v904 = vsub.f32 %v266, %v903
  %905 = vmatprep.subr.mxu0 %v904
  %v906 = vand.u32 %v265, 4294901760
  %v907 = vsub.f32 %v265, %v906
  %908 = vmatpush2.msra.mxu0 %v907
  %v909 = vand.u32 %v264, 4294901760
  %v910 = vsub.f32 %v264, %v909
  %911 = vmatprep.subr.mxu0 %v910
  %v912 = vand.u32 %v263, 4294901760
  %v913 = vsub.f32 %v263, %v912
  %914 = vmatpush2.msra.mxu0 %v913
  %v915 = vand.u32 %v262, 4294901760
  %v916 = vsub.f32 %v262, %v915
  %917 = vmatprep.subr.mxu0 %v916
  %v918 = vand.u32 %v261, 4294901760
  %v919 = vsub.f32 %v261, %v918
  %920 = vmatpush2.msra.mxu0 %v919
  %v921 = vand.u32 %v260, 4294901760
  %v922 = vsub.f32 %v260, %v921
  %923 = vmatprep.subr.mxu0 %v922
  %v924 = vand.u32 %v259, 4294901760
  %v925 = vsub.f32 %v259, %v924
  %926 = vmatpush2.msra.mxu0 %v925
  %v927 = vand.u32 %v258, 4294901760
  %v928 = vsub.f32 %v258, %v927
  %929 = vmatprep.subr.mxu0 %v928
  %v930 = vand.u32 %v257, 4294901760
  %v931 = vsub.f32 %v257, %v930
  %932 = vmatpush2.msra.mxu0 %v931
  %v933 = vand.u32 %v256, 4294901760
  %v934 = vsub.f32 %v256, %v933
  %935 = vmatprep.subr.mxu0 %v934
  %v936 = vand.u32 %v255, 4294901760
  %v937 = vsub.f32 %v255, %v936
  %938 = vmatpush2.msra.mxu0 %v937
  %v939 = vand.u32 %v254, 4294901760
  %v940 = vsub.f32 %v254, %v939
  %941 = vmatprep.subr.mxu0 %v940
  %v942 = vand.u32 %v253, 4294901760
  %v943 = vsub.f32 %v253, %v942
  %944 = vmatpush2.msra.mxu0 %v943
  %v945 = vand.u32 %v252, 4294901760
  %v946 = vsub.f32 %v252, %v945
  %947 = vmatprep.subr.mxu0 %v946
  %v948 = vand.u32 %v251, 4294901760
  %v949 = vsub.f32 %v251, %v948
  %950 = vmatpush2.msra.mxu0 %v949
  %v951 = vand.u32 %v250, 4294901760
  %v952 = vsub.f32 %v250, %v951
  %953 = vmatprep.subr.mxu0 %v952
  %v954 = vand.u32 %v249, 4294901760
  %v955 = vsub.f32 %v249, %v954
  %956 = vmatpush2.msra.mxu0 %v955
  %v957 = vand.u32 %v248, 4294901760
  %v958 = vsub.f32 %v248, %v957
  %959 = vmatprep.subr.mxu0 %v958
  %v960 = vand.u32 %v247, 4294901760
  %v961 = vsub.f32 %v247, %v960
  %962 = vmatpush2.msra.mxu0 %v961
  %v963 = vand.u32 %v246, 4294901760
  %v964 = vsub.f32 %v246, %v963
  %965 = vmatprep.subr.mxu0 %v964
  %v966 = vand.u32 %v245, 4294901760
  %v967 = vsub.f32 %v245, %v966
  %968 = vmatpush2.msra.mxu0 %v967
  %v969 = vand.u32 %v244, 4294901760
  %v970 = vsub.f32 %v244, %v969
  %971 = vmatprep.subr.mxu0 %v970
  %v972 = vand.u32 %v243, 4294901760
  %v973 = vsub.f32 %v243, %v972
  %974 = vmatpush2.msra.mxu0 %v973
  %v975 = vand.u32 %v242, 4294901760
  %v976 = vsub.f32 %v242, %v975
  %977 = vmatprep.subr.mxu0 %v976
  %v978 = vand.u32 %v241, 4294901760
  %v979 = vsub.f32 %v241, %v978
  %980 = vmatpush2.msra.mxu0 %v979
  %v981 = vand.u32 %v240, 4294901760
  %v982 = vsub.f32 %v240, %v981
  %983 = vmatprep.subr.mxu0 %v982
  %v984 = vand.u32 %v239, 4294901760
  %v985 = vsub.f32 %v239, %v984
  %986 = vmatpush2.msra.mxu0 %v985
  %v987 = vand.u32 %v238, 4294901760
  %v988 = vsub.f32 %v238, %v987
  %989 = vmatprep.subr.mxu0 %v988
  %v990 = vand.u32 %v237, 4294901760
  %v991 = vsub.f32 %v237, %v990
  %992 = vmatpush2.msra.mxu0 %v991
  %v993 = vand.u32 %v236, 4294901760
  %v994 = vsub.f32 %v236, %v993
  %995 = vmatprep.subr.mxu0 %v994
  %v996 = vand.u32 %v235, 4294901760
  %v997 = vsub.f32 %v235, %v996
  %998 = vmatpush2.msra.mxu0 %v997
  %v999 = vand.u32 %v268, 4294901760
  %v1000 = vsub.f32 %v268, %v999
  %1001 = vmatprep.mubr.f32.mxu0 %v1000
  %v1002 = vand.u32 %v267, 4294901760
  %v1003 = vsub.f32 %v267, %v1002
  %1004 = vmatmul.mubr.f32.gmra.mxu0 %v1003
  %v1005 = vpop.f32.mrf.mxu0
  %v1006 = vadd.f32 %v803, %v1005
  %v1007 = vpop.f32.mrf.mxu0
  %v1008 = vadd.f32 %v805, %v1007
  %1009 = vdwg.mxu0
  %v1010 = vand.u32 %v234, 4294901760
  %1011 = vmatprep.subr.mxu0 %v1010
  %v1012 = vand.u32 %v233, 4294901760
  %1013 = vmatpush1.msra.mxu0 %v1012
  %v1014 = vand.u32 %v232, 4294901760
  %1015 = vmatprep.subr.mxu0 %v1014
  %v1016 = vand.u32 %v231, 4294901760
  %1017 = vmatpush1.msra.mxu0 %v1016
  %v1018 = vand.u32 %v230, 4294901760
  %1019 = vmatprep.subr.mxu0 %v1018
  %v1020 = vand.u32 %v229, 4294901760
  %1021 = vmatpush1.msra.mxu0 %v1020
  %v1022 = vand.u32 %v228, 4294901760
  %1023 = vmatprep.subr.mxu0 %v1022
  %v1024 = vand.u32 %v227, 4294901760
  %1025 = vmatpush1.msra.mxu0 %v1024
  %v1026 = vand.u32 %v226, 4294901760
  %1027 = vmatprep.subr.mxu0 %v1026
  %v1028 = vand.u32 %v225, 4294901760
  %1029 = vmatpush1.msra.mxu0 %v1028
  %v1030 = vand.u32 %v224, 4294901760
  %1031 = vmatprep.subr.mxu0 %v1030
  %v1032 = vand.u32 %v223, 4294901760
  %1033 = vmatpush1.msra.mxu0 %v1032
  %v1034 = vand.u32 %v222, 4294901760
  %1035 = vmatprep.subr.mxu0 %v1034
  %v1036 = vand.u32 %v221, 4294901760
  %1037 = vmatpush1.msra.mxu0 %v1036
  %v1038 = vand.u32 %v220, 4294901760
  %1039 = vmatprep.subr.mxu0 %v1038
  %v1040 = vand.u32 %v219, 4294901760
  %1041 = vmatpush1.msra.mxu0 %v1040
  %v1042 = vand.u32 %v218, 4294901760
  %1043 = vmatprep.subr.mxu0 %v1042
  %v1044 = vand.u32 %v217, 4294901760
  %1045 = vmatpush1.msra.mxu0 %v1044
  %v1046 = vand.u32 %v216, 4294901760
  %1047 = vmatprep.subr.mxu0 %v1046
  %v1048 = vand.u32 %v215, 4294901760
  %1049 = vmatpush1.msra.mxu0 %v1048
  %v1050 = vand.u32 %v214, 4294901760
  %1051 = vmatprep.subr.mxu0 %v1050
  %v1052 = vand.u32 %v213, 4294901760
  %1053 = vmatpush1.msra.mxu0 %v1052
  %v1054 = vand.u32 %v212, 4294901760
  %1055 = vmatprep.subr.mxu0 %v1054
  %v1056 = vand.u32 %v211, 4294901760
  %1057 = vmatpush1.msra.mxu0 %v1056
  %v1058 = vand.u32 %v210, 4294901760
  %1059 = vmatprep.subr.mxu0 %v1058
  %v1060 = vand.u32 %v209, 4294901760
  %1061 = vmatpush1.msra.mxu0 %v1060
  %v1062 = vand.u32 %v208, 4294901760
  %1063 = vmatprep.subr.mxu0 %v1062
  %v1064 = vand.u32 %v207, 4294901760
  %1065 = vmatpush1.msra.mxu0 %v1064
  %v1066 = vand.u32 %v206, 4294901760
  %1067 = vmatprep.subr.mxu0 %v1066
  %v1068 = vand.u32 %v205, 4294901760
  %1069 = vmatpush1.msra.mxu0 %v1068
  %v1070 = vand.u32 %v204, 4294901760
  %1071 = vmatprep.subr.mxu0 %v1070
  %v1072 = vand.u32 %v203, 4294901760
  %1073 = vmatpush1.msra.mxu0 %v1072
  %v1074 = vand.u32 %v266, 4294901760
  %1075 = vmatprep.subr.mxu0 %v1074
  %v1076 = vand.u32 %v265, 4294901760
  %1077 = vmatpush2.msra.mxu0 %v1076
  %v1078 = vand.u32 %v264, 4294901760
  %1079 = vmatprep.subr.mxu0 %v1078
  %v1080 = vand.u32 %v263, 4294901760
  %1081 = vmatpush2.msra.mxu0 %v1080
  %v1082 = vand.u32 %v262, 4294901760
  %1083 = vmatprep.subr.mxu0 %v1082
  %v1084 = vand.u32 %v261, 4294901760
  %1085 = vmatpush2.msra.mxu0 %v1084
  %v1086 = vand.u32 %v260, 4294901760
  %1087 = vmatprep.subr.mxu0 %v1086
  %v1088 = vand.u32 %v259, 4294901760
  %1089 = vmatpush2.msra.mxu0 %v1088
  %v1090 = vand.u32 %v258, 4294901760
  %1091 = vmatprep.subr.mxu0 %v1090
  %v1092 = vand.u32 %v257, 4294901760
  %1093 = vmatpush2.msra.mxu0 %v1092
  %v1094 = vand.u32 %v256, 4294901760
  %1095 = vmatprep.subr.mxu0 %v1094
  %v1096 = vand.u32 %v255, 4294901760
  %1097 = vmatpush2.msra.mxu0 %v1096
  %v1098 = vand.u32 %v254, 4294901760
  %1099 = vmatprep.subr.mxu0 %v1098
  %v1100 = vand.u32 %v253, 4294901760
  %1101 = vmatpush2.msra.mxu0 %v1100
  %v1102 = vand.u32 %v252, 4294901760
  %1103 = vmatprep.subr.mxu0 %v1102
  %v1104 = vand.u32 %v251, 4294901760
  %1105 = vmatpush2.msra.mxu0 %v1104
  %v1106 = vand.u32 %v250, 4294901760
  %1107 = vmatprep.subr.mxu0 %v1106
  %v1108 = vand.u32 %v249, 4294901760
  %1109 = vmatpush2.msra.mxu0 %v1108
  %v1110 = vand.u32 %v248, 4294901760
  %1111 = vmatprep.subr.mxu0 %v1110
  %v1112 = vand.u32 %v247, 4294901760
  %1113 = vmatpush2.msra.mxu0 %v1112
  %v1114 = vand.u32 %v246, 4294901760
  %1115 = vmatprep.subr.mxu0 %v1114
  %v1116 = vand.u32 %v245, 4294901760
  %1117 = vmatpush2.msra.mxu0 %v1116
  %v1118 = vand.u32 %v244, 4294901760
  %1119 = vmatprep.subr.mxu0 %v1118
  %v1120 = vand.u32 %v243, 4294901760
  %1121 = vmatpush2.msra.mxu0 %v1120
  %v1122 = vand.u32 %v242, 4294901760
  %1123 = vmatprep.subr.mxu0 %v1122
  %v1124 = vand.u32 %v241, 4294901760
  %1125 = vmatpush2.msra.mxu0 %v1124
  %v1126 = vand.u32 %v240, 4294901760
  %1127 = vmatprep.subr.mxu0 %v1126
  %v1128 = vand.u32 %v239, 4294901760
  %1129 = vmatpush2.msra.mxu0 %v1128
  %v1130 = vand.u32 %v238, 4294901760
  %1131 = vmatprep.subr.mxu0 %v1130
  %v1132 = vand.u32 %v237, 4294901760
  %1133 = vmatpush2.msra.mxu0 %v1132
  %v1134 = vand.u32 %v236, 4294901760
  %1135 = vmatprep.subr.mxu0 %v1134
  %v1136 = vand.u32 %v235, 4294901760
  %1137 = vmatpush2.msra.mxu0 %v1136
  %v1138 = vand.u32 %v268, 4294901760
  %v1139 = vsub.f32 %v268, %v1138
  %v1140 = vand.u32 %v1139, 4294901760
  %1141 = vmatprep.mubr.f32.mxu0 %v1140
  %v1142 = vand.u32 %v267, 4294901760
  %v1143 = vsub.f32 %v267, %v1142
  %v1144 = vand.u32 %v1143, 4294901760
  %1145 = vmatmul.mubr.f32.gmra.mxu0 %v1144
  %v1146 = vpop.f32.mrf.mxu0
  %v1147 = vadd.f32 %v1006, %v1146
  %v1148 = vpop.f32.mrf.mxu0
  %v1149 = vadd.f32 %v1008, %v1148
  %1150 = vdwg.mxu0
  %v1151 = vand.u32 %v234, 4294901760
  %v1152 = vsub.f32 %v234, %v1151
  %v1153 = vand.u32 %v1152, 4294901760
  %1154 = vmatprep.subr.mxu0 %v1153
  %v1155 = vand.u32 %v233, 4294901760
  %v1156 = vsub.f32 %v233, %v1155
  %v1157 = vand.u32 %v1156, 4294901760
  %1158 = vmatpush1.msra.mxu0 %v1157
  %v1159 = vand.u32 %v232, 4294901760
  %v1160 = vsub.f32 %v232, %v1159
  %v1161 = vand.u32 %v1160, 4294901760
  %1162 = vmatprep.subr.mxu0 %v1161
  %v1163 = vand.u32 %v231, 4294901760
  %v1164 = vsub.f32 %v231, %v1163
  %v1165 = vand.u32 %v1164, 4294901760
  %1166 = vmatpush1.msra.mxu0 %v1165
  %v1167 = vand.u32 %v230, 4294901760
  %v1168 = vsub.f32 %v230, %v1167
  %v1169 = vand.u32 %v1168, 4294901760
  %1170 = vmatprep.subr.mxu0 %v1169
  %v1171 = vand.u32 %v229, 4294901760
  %v1172 = vsub.f32 %v229, %v1171
  %v1173 = vand.u32 %v1172, 4294901760
  %1174 = vmatpush1.msra.mxu0 %v1173
  %v1175 = vand.u32 %v228, 4294901760
  %v1176 = vsub.f32 %v228, %v1175
  %v1177 = vand.u32 %v1176, 4294901760
  %1178 = vmatprep.subr.mxu0 %v1177
  %v1179 = vand.u32 %v227, 4294901760
  %v1180 = vsub.f32 %v227, %v1179
  %v1181 = vand.u32 %v1180, 4294901760
  %1182 = vmatpush1.msra.mxu0 %v1181
  %v1183 = vand.u32 %v226, 4294901760
  %v1184 = vsub.f32 %v226, %v1183
  %v1185 = vand.u32 %v1184, 4294901760
  %1186 = vmatprep.subr.mxu0 %v1185
  %v1187 = vand.u32 %v225, 4294901760
  %v1188 = vsub.f32 %v225, %v1187
  %v1189 = vand.u32 %v1188, 4294901760
  %1190 = vmatpush1.msra.mxu0 %v1189
  %v1191 = vand.u32 %v224, 4294901760
  %v1192 = vsub.f32 %v224, %v1191
  %v1193 = vand.u32 %v1192, 4294901760
  %1194 = vmatprep.subr.mxu0 %v1193
  %v1195 = vand.u32 %v223, 4294901760
  %v1196 = vsub.f32 %v223, %v1195
  %v1197 = vand.u32 %v1196, 4294901760
  %1198 = vmatpush1.msra.mxu0 %v1197
  %v1199 = vand.u32 %v222, 4294901760
  %v1200 = vsub.f32 %v222, %v1199
  %v1201 = vand.u32 %v1200, 4294901760
  %1202 = vmatprep.subr.mxu0 %v1201
  %v1203 = vand.u32 %v221, 4294901760
  %v1204 = vsub.f32 %v221, %v1203
  %v1205 = vand.u32 %v1204, 4294901760
  %1206 = vmatpush1.msra.mxu0 %v1205
  %v1207 = vand.u32 %v220, 4294901760
  %v1208 = vsub.f32 %v220, %v1207
  %v1209 = vand.u32 %v1208, 4294901760
  %1210 = vmatprep.subr.mxu0 %v1209
  %v1211 = vand.u32 %v219, 4294901760
  %v1212 = vsub.f32 %v219, %v1211
  %v1213 = vand.u32 %v1212, 4294901760
  %1214 = vmatpush1.msra.mxu0 %v1213
  %v1215 = vand.u32 %v218, 4294901760
  %v1216 = vsub.f32 %v218, %v1215
  %v1217 = vand.u32 %v1216, 4294901760
  %1218 = vmatprep.subr.mxu0 %v1217
  %v1219 = vand.u32 %v217, 4294901760
  %v1220 = vsub.f32 %v217, %v1219
  %v1221 = vand.u32 %v1220, 4294901760
  %1222 = vmatpush1.msra.mxu0 %v1221
  %v1223 = vand.u32 %v216, 4294901760
  %v1224 = vsub.f32 %v216, %v1223
  %v1225 = vand.u32 %v1224, 4294901760
  %1226 = vmatprep.subr.mxu0 %v1225
  %v1227 = vand.u32 %v215, 4294901760
  %v1228 = vsub.f32 %v215, %v1227
  %v1229 = vand.u32 %v1228, 4294901760
  %1230 = vmatpush1.msra.mxu0 %v1229
  %v1231 = vand.u32 %v214, 4294901760
  %v1232 = vsub.f32 %v214, %v1231
  %v1233 = vand.u32 %v1232, 4294901760
  %1234 = vmatprep.subr.mxu0 %v1233
  %v1235 = vand.u32 %v213, 4294901760
  %v1236 = vsub.f32 %v213, %v1235
  %v1237 = vand.u32 %v1236, 4294901760
  %1238 = vmatpush1.msra.mxu0 %v1237
  %v1239 = vand.u32 %v212, 4294901760
  %v1240 = vsub.f32 %v212, %v1239
  %v1241 = vand.u32 %v1240, 4294901760
  %1242 = vmatprep.subr.mxu0 %v1241
  %v1243 = vand.u32 %v211, 4294901760
  %v1244 = vsub.f32 %v211, %v1243
  %v1245 = vand.u32 %v1244, 4294901760
  %1246 = vmatpush1.msra.mxu0 %v1245
  %v1247 = vand.u32 %v210, 4294901760
  %v1248 = vsub.f32 %v210, %v1247
  %v1249 = vand.u32 %v1248, 4294901760
  %1250 = vmatprep.subr.mxu0 %v1249
  %v1251 = vand.u32 %v209, 4294901760
  %v1252 = vsub.f32 %v209, %v1251
  %v1253 = vand.u32 %v1252, 4294901760
  %1254 = vmatpush1.msra.mxu0 %v1253
  %v1255 = vand.u32 %v208, 4294901760
  %v1256 = vsub.f32 %v208, %v1255
  %v1257 = vand.u32 %v1256, 4294901760
  %1258 = vmatprep.subr.mxu0 %v1257
  %v1259 = vand.u32 %v207, 4294901760
  %v1260 = vsub.f32 %v207, %v1259
  %v1261 = vand.u32 %v1260, 4294901760
  %1262 = vmatpush1.msra.mxu0 %v1261
  %v1263 = vand.u32 %v206, 4294901760
  %v1264 = vsub.f32 %v206, %v1263
  %v1265 = vand.u32 %v1264, 4294901760
  %1266 = vmatprep.subr.mxu0 %v1265
  %v1267 = vand.u32 %v205, 4294901760
  %v1268 = vsub.f32 %v205, %v1267
  %v1269 = vand.u32 %v1268, 4294901760
  %1270 = vmatpush1.msra.mxu0 %v1269
  %v1271 = vand.u32 %v204, 4294901760
  %v1272 = vsub.f32 %v204, %v1271
  %v1273 = vand.u32 %v1272, 4294901760
  %1274 = vmatprep.subr.mxu0 %v1273
  %v1275 = vand.u32 %v203, 4294901760
  %v1276 = vsub.f32 %v203, %v1275
  %v1277 = vand.u32 %v1276, 4294901760
  %1278 = vmatpush1.msra.mxu0 %v1277
  %v1279 = vand.u32 %v266, 4294901760
  %v1280 = vsub.f32 %v266, %v1279
  %v1281 = vand.u32 %v1280, 4294901760
  %1282 = vmatprep.subr.mxu0 %v1281
  %v1283 = vand.u32 %v265, 4294901760
  %v1284 = vsub.f32 %v265, %v1283
  %v1285 = vand.u32 %v1284, 4294901760
  %1286 = vmatpush2.msra.mxu0 %v1285
  %v1287 = vand.u32 %v264, 4294901760
  %v1288 = vsub.f32 %v264, %v1287
  %v1289 = vand.u32 %v1288, 4294901760
  %1290 = vmatprep.subr.mxu0 %v1289
  %v1291 = vand.u32 %v263, 4294901760
  %v1292 = vsub.f32 %v263, %v1291
  %v1293 = vand.u32 %v1292, 4294901760
  %1294 = vmatpush2.msra.mxu0 %v1293
  %v1295 = vand.u32 %v262, 4294901760
  %v1296 = vsub.f32 %v262, %v1295
  %v1297 = vand.u32 %v1296, 4294901760
  %1298 = vmatprep.subr.mxu0 %v1297
  %v1299 = vand.u32 %v261, 4294901760
  %v1300 = vsub.f32 %v261, %v1299
  %v1301 = vand.u32 %v1300, 4294901760
  %1302 = vmatpush2.msra.mxu0 %v1301
  %v1303 = vand.u32 %v260, 4294901760
  %v1304 = vsub.f32 %v260, %v1303
  %v1305 = vand.u32 %v1304, 4294901760
  %1306 = vmatprep.subr.mxu0 %v1305
  %v1307 = vand.u32 %v259, 4294901760
  %v1308 = vsub.f32 %v259, %v1307
  %v1309 = vand.u32 %v1308, 4294901760
  %1310 = vmatpush2.msra.mxu0 %v1309
  %v1311 = vand.u32 %v258, 4294901760
  %v1312 = vsub.f32 %v258, %v1311
  %v1313 = vand.u32 %v1312, 4294901760
  %1314 = vmatprep.subr.mxu0 %v1313
  %v1315 = vand.u32 %v257, 4294901760
  %v1316 = vsub.f32 %v257, %v1315
  %v1317 = vand.u32 %v1316, 4294901760
  %1318 = vmatpush2.msra.mxu0 %v1317
  %v1319 = vand.u32 %v256, 4294901760
  %v1320 = vsub.f32 %v256, %v1319
  %v1321 = vand.u32 %v1320, 4294901760
  %1322 = vmatprep.subr.mxu0 %v1321
  %v1323 = vand.u32 %v255, 4294901760
  %v1324 = vsub.f32 %v255, %v1323
  %v1325 = vand.u32 %v1324, 4294901760
  %1326 = vmatpush2.msra.mxu0 %v1325
  %v1327 = vand.u32 %v254, 4294901760
  %v1328 = vsub.f32 %v254, %v1327
  %v1329 = vand.u32 %v1328, 4294901760
  %1330 = vmatprep.subr.mxu0 %v1329
  %v1331 = vand.u32 %v253, 4294901760
  %v1332 = vsub.f32 %v253, %v1331
  %v1333 = vand.u32 %v1332, 4294901760
  %1334 = vmatpush2.msra.mxu0 %v1333
  %v1335 = vand.u32 %v252, 4294901760
  %v1336 = vsub.f32 %v252, %v1335
  %v1337 = vand.u32 %v1336, 4294901760
  %1338 = vmatprep.subr.mxu0 %v1337
  %v1339 = vand.u32 %v251, 4294901760
  %v1340 = vsub.f32 %v251, %v1339
  %v1341 = vand.u32 %v1340, 4294901760
  %1342 = vmatpush2.msra.mxu0 %v1341
  %v1343 = vand.u32 %v250, 4294901760
  %v1344 = vsub.f32 %v250, %v1343
  %v1345 = vand.u32 %v1344, 4294901760
  %1346 = vmatprep.subr.mxu0 %v1345
  %v1347 = vand.u32 %v249, 4294901760
  %v1348 = vsub.f32 %v249, %v1347
  %v1349 = vand.u32 %v1348, 4294901760
  %1350 = vmatpush2.msra.mxu0 %v1349
  %v1351 = vand.u32 %v248, 4294901760
  %v1352 = vsub.f32 %v248, %v1351
  %v1353 = vand.u32 %v1352, 4294901760
  %1354 = vmatprep.subr.mxu0 %v1353
  %v1355 = vand.u32 %v247, 4294901760
  %v1356 = vsub.f32 %v247, %v1355
  %v1357 = vand.u32 %v1356, 4294901760
  %1358 = vmatpush2.msra.mxu0 %v1357
  %v1359 = vand.u32 %v246, 4294901760
  %v1360 = vsub.f32 %v246, %v1359
  %v1361 = vand.u32 %v1360, 4294901760
  %1362 = vmatprep.subr.mxu0 %v1361
  %v1363 = vand.u32 %v245, 4294901760
  %v1364 = vsub.f32 %v245, %v1363
  %v1365 = vand.u32 %v1364, 4294901760
  %1366 = vmatpush2.msra.mxu0 %v1365
  %v1367 = vand.u32 %v244, 4294901760
  %v1368 = vsub.f32 %v244, %v1367
  %v1369 = vand.u32 %v1368, 4294901760
  %1370 = vmatprep.subr.mxu0 %v1369
  %v1371 = vand.u32 %v243, 4294901760
  %v1372 = vsub.f32 %v243, %v1371
  %v1373 = vand.u32 %v1372, 4294901760
  %1374 = vmatpush2.msra.mxu0 %v1373
  %v1375 = vand.u32 %v242, 4294901760
  %v1376 = vsub.f32 %v242, %v1375
  %v1377 = vand.u32 %v1376, 4294901760
  %1378 = vmatprep.subr.mxu0 %v1377
  %v1379 = vand.u32 %v241, 4294901760
  %v1380 = vsub.f32 %v241, %v1379
  %v1381 = vand.u32 %v1380, 4294901760
  %1382 = vmatpush2.msra.mxu0 %v1381
  %v1383 = vand.u32 %v240, 4294901760
  %v1384 = vsub.f32 %v240, %v1383
  %v1385 = vand.u32 %v1384, 4294901760
  %1386 = vmatprep.subr.mxu0 %v1385
  %v1387 = vand.u32 %v239, 4294901760
  %v1388 = vsub.f32 %v239, %v1387
  %v1389 = vand.u32 %v1388, 4294901760
  %1390 = vmatpush2.msra.mxu0 %v1389
  %v1391 = vand.u32 %v238, 4294901760
  %v1392 = vsub.f32 %v238, %v1391
  %v1393 = vand.u32 %v1392, 4294901760
  %1394 = vmatprep.subr.mxu0 %v1393
  %v1395 = vand.u32 %v237, 4294901760
  %v1396 = vsub.f32 %v237, %v1395
  %v1397 = vand.u32 %v1396, 4294901760
  %1398 = vmatpush2.msra.mxu0 %v1397
  %v1399 = vand.u32 %v236, 4294901760
  %v1400 = vsub.f32 %v236, %v1399
  %v1401 = vand.u32 %v1400, 4294901760
  %1402 = vmatprep.subr.mxu0 %v1401
  %v1403 = vand.u32 %v235, 4294901760
  %v1404 = vsub.f32 %v235, %v1403
  %v1405 = vand.u32 %v1404, 4294901760
  %1406 = vmatpush2.msra.mxu0 %v1405
  %v1407 = vand.u32 %v268, 4294901760
  %1408 = vmatprep.mubr.f32.mxu0 %v1407
  %v1409 = vand.u32 %v267, 4294901760
  %1410 = vmatmul.mubr.f32.gmra.mxu0 %v1409
  %v1411 = vpop.f32.mrf.mxu0
  %v1412 = vadd.f32 %v1147, %v1411
  %v1413 = vpop.f32.mrf.mxu0
  %v1414 = vadd.f32 %v1149, %v1413
  %1415 = vdwg.mxu0
  %v1416 = vand.u32 %v234, 4294901760
  %1417 = vmatprep.subr.mxu0 %v1416
  %v1418 = vand.u32 %v233, 4294901760
  %1419 = vmatpush1.msra.mxu0 %v1418
  %v1420 = vand.u32 %v232, 4294901760
  %1421 = vmatprep.subr.mxu0 %v1420
  %v1422 = vand.u32 %v231, 4294901760
  %1423 = vmatpush1.msra.mxu0 %v1422
  %v1424 = vand.u32 %v230, 4294901760
  %1425 = vmatprep.subr.mxu0 %v1424
  %v1426 = vand.u32 %v229, 4294901760
  %1427 = vmatpush1.msra.mxu0 %v1426
  %v1428 = vand.u32 %v228, 4294901760
  %1429 = vmatprep.subr.mxu0 %v1428
  %v1430 = vand.u32 %v227, 4294901760
  %1431 = vmatpush1.msra.mxu0 %v1430
  %v1432 = vand.u32 %v226, 4294901760
  %1433 = vmatprep.subr.mxu0 %v1432
  %v1434 = vand.u32 %v225, 4294901760
  %1435 = vmatpush1.msra.mxu0 %v1434
  %v1436 = vand.u32 %v224, 4294901760
  %1437 = vmatprep.subr.mxu0 %v1436
  %v1438 = vand.u32 %v223, 4294901760
  %1439 = vmatpush1.msra.mxu0 %v1438
  %v1440 = vand.u32 %v222, 4294901760
  %1441 = vmatprep.subr.mxu0 %v1440
  %v1442 = vand.u32 %v221, 4294901760
  %1443 = vmatpush1.msra.mxu0 %v1442
  %v1444 = vand.u32 %v220, 4294901760
  %1445 = vmatprep.subr.mxu0 %v1444
  %v1446 = vand.u32 %v219, 4294901760
  %1447 = vmatpush1.msra.mxu0 %v1446
  %v1448 = vand.u32 %v218, 4294901760
  %1449 = vmatprep.subr.mxu0 %v1448
  %v1450 = vand.u32 %v217, 4294901760
  %1451 = vmatpush1.msra.mxu0 %v1450
  %v1452 = vand.u32 %v216, 4294901760
  %1453 = vmatprep.subr.mxu0 %v1452
  %v1454 = vand.u32 %v215, 4294901760
  %1455 = vmatpush1.msra.mxu0 %v1454
  %v1456 = vand.u32 %v214, 4294901760
  %1457 = vmatprep.subr.mxu0 %v1456
  %v1458 = vand.u32 %v213, 4294901760
  %1459 = vmatpush1.msra.mxu0 %v1458
  %v1460 = vand.u32 %v212, 4294901760
  %1461 = vmatprep.subr.mxu0 %v1460
  %v1462 = vand.u32 %v211, 4294901760
  %1463 = vmatpush1.msra.mxu0 %v1462
  %v1464 = vand.u32 %v210, 4294901760
  %1465 = vmatprep.subr.mxu0 %v1464
  %v1466 = vand.u32 %v209, 4294901760
  %1467 = vmatpush1.msra.mxu0 %v1466
  %v1468 = vand.u32 %v208, 4294901760
  %1469 = vmatprep.subr.mxu0 %v1468
  %v1470 = vand.u32 %v207, 4294901760
  %1471 = vmatpush1.msra.mxu0 %v1470
  %v1472 = vand.u32 %v206, 4294901760
  %1473 = vmatprep.subr.mxu0 %v1472
  %v1474 = vand.u32 %v205, 4294901760
  %1475 = vmatpush1.msra.mxu0 %v1474
  %v1476 = vand.u32 %v204, 4294901760
  %1477 = vmatprep.subr.mxu0 %v1476
  %v1478 = vand.u32 %v203, 4294901760
  %1479 = vmatpush1.msra.mxu0 %v1478
  %v1480 = vand.u32 %v266, 4294901760
  %1481 = vmatprep.subr.mxu0 %v1480
  %v1482 = vand.u32 %v265, 4294901760
  %1483 = vmatpush2.msra.mxu0 %v1482
  %v1484 = vand.u32 %v264, 4294901760
  %1485 = vmatprep.subr.mxu0 %v1484
  %v1486 = vand.u32 %v263, 4294901760
  %1487 = vmatpush2.msra.mxu0 %v1486
  %v1488 = vand.u32 %v262, 4294901760
  %1489 = vmatprep.subr.mxu0 %v1488
  %v1490 = vand.u32 %v261, 4294901760
  %1491 = vmatpush2.msra.mxu0 %v1490
  %v1492 = vand.u32 %v260, 4294901760
  %1493 = vmatprep.subr.mxu0 %v1492
  %v1494 = vand.u32 %v259, 4294901760
  %1495 = vmatpush2.msra.mxu0 %v1494
  %v1496 = vand.u32 %v258, 4294901760
  %1497 = vmatprep.subr.mxu0 %v1496
  %v1498 = vand.u32 %v257, 4294901760
  %1499 = vmatpush2.msra.mxu0 %v1498
  %v1500 = vand.u32 %v256, 4294901760
  %1501 = vmatprep.subr.mxu0 %v1500
  %v1502 = vand.u32 %v255, 4294901760
  %1503 = vmatpush2.msra.mxu0 %v1502
  %v1504 = vand.u32 %v254, 4294901760
  %1505 = vmatprep.subr.mxu0 %v1504
  %v1506 = vand.u32 %v253, 4294901760
  %1507 = vmatpush2.msra.mxu0 %v1506
  %v1508 = vand.u32 %v252, 4294901760
  %1509 = vmatprep.subr.mxu0 %v1508
  %v1510 = vand.u32 %v251, 4294901760
  %1511 = vmatpush2.msra.mxu0 %v1510
  %v1512 = vand.u32 %v250, 4294901760
  %1513 = vmatprep.subr.mxu0 %v1512
  %v1514 = vand.u32 %v249, 4294901760
  %1515 = vmatpush2.msra.mxu0 %v1514
  %v1516 = vand.u32 %v248, 4294901760
  %1517 = vmatprep.subr.mxu0 %v1516
  %v1518 = vand.u32 %v247, 4294901760
  %1519 = vmatpush2.msra.mxu0 %v1518
  %v1520 = vand.u32 %v246, 4294901760
  %1521 = vmatprep.subr.mxu0 %v1520
  %v1522 = vand.u32 %v245, 4294901760
  %1523 = vmatpush2.msra.mxu0 %v1522
  %v1524 = vand.u32 %v244, 4294901760
  %1525 = vmatprep.subr.mxu0 %v1524
  %v1526 = vand.u32 %v243, 4294901760
  %1527 = vmatpush2.msra.mxu0 %v1526
  %v1528 = vand.u32 %v242, 4294901760
  %1529 = vmatprep.subr.mxu0 %v1528
  %v1530 = vand.u32 %v241, 4294901760
  %1531 = vmatpush2.msra.mxu0 %v1530
  %v1532 = vand.u32 %v240, 4294901760
  %1533 = vmatprep.subr.mxu0 %v1532
  %v1534 = vand.u32 %v239, 4294901760
  %1535 = vmatpush2.msra.mxu0 %v1534
  %v1536 = vand.u32 %v238, 4294901760
  %1537 = vmatprep.subr.mxu0 %v1536
  %v1538 = vand.u32 %v237, 4294901760
  %1539 = vmatpush2.msra.mxu0 %v1538
  %v1540 = vand.u32 %v236, 4294901760
  %1541 = vmatprep.subr.mxu0 %v1540
  %v1542 = vand.u32 %v235, 4294901760
  %1543 = vmatpush2.msra.mxu0 %v1542
  %v1544 = vand.u32 %v268, 4294901760
  %1545 = vmatprep.mubr.f32.mxu0 %v1544
  %v1546 = vand.u32 %v267, 4294901760
  %1547 = vmatmul.mubr.f32.gmra.mxu0 %v1546
  %v1548 = vpop.f32.mrf.mxu0
  %v1549 = vadd.f32 %v1412, %v1548
  %v1550 = vpop.f32.mrf.mxu0
  %v1551 = vadd.f32 %v1414, %v1550
  %1552 = vdwg.mxu0
  %1553 = vst [vmem:[%s2] sm:$0xff] %v1549
  %1554 = vst [vmem:[%s2 + $0x8] sm:$0xff] %v1551
  // Predicated region
  $region10: #{gtm_loc_enc.1} parent=0 // pred_check
    _
  $region11: #{gtm_loc_enc.1} parent=0 // pred_check_branch
    %1556 = sbr.rel (0) target = $region13
  $region12: #{gtm_loc_enc.1} parent=0 // pred_region
    _
  $region13: #{gtm_loc_enc.1} parent=0 // pred_fallthru
    _
  // Predicated region
  $region14: #{gtm_loc_enc.1} parent=0 // pred_check
    _
  $region15: #{gtm_loc_enc.1} parent=0 // pred_check_branch
    %1558 = sbr.rel (0) target = $region17
  $region16: #{gtm_loc_enc.1} parent=0 // pred_region
    _
  $region17: #{gtm_loc_enc.1} parent=0 // pred_fallthru
    _

</llo_original>
